<compile_context>
chip_gen: v6e
topology: v6e:2x2x1
jax: 0.10.0
libtpu: 0.0.40
codegen_flags: <defaults>
</compile_context>

<pallas_src>
import functools

import jax
import jax.numpy as jnp
from jax import lax
from jax.experimental import pallas as pl
from jax.experimental.pallas import tpu as pltpu

_MIB = 1024 * 1024


def _lm_head_kernel(x_ref, w_ref, o_ref):
    """One (tm, tn) logits tile.

    x_ref: [tm, K]  activations (resident across the vocab axis of the grid)
    w_ref: [tn, K]  weight rows in the native [vocab, hidden] layout
    o_ref: [tm, tn] logits tile
    Contract the last dims of both operands: (tm,K) x (tn,K) -> (tm,tn) == x @ W^T.
    """
    o_ref[...] = lax.dot_general(
        x_ref[...],
        w_ref[...],
        dimension_numbers=(((1,), (1,)), ((), ())),
        preferred_element_type=jnp.float32,
    ).astype(o_ref.dtype)


def _select_tiles(M, N, K, x_bytes, w_bytes, o_bytes, tm_max, tn_max, budget):
    """Pick (tm, tn) so the double-buffered blocks fit `budget` bytes of VMEM."""
    tm = M if M <= tm_max else tm_max
    tn = N if N <= tn_max else tn_max

    def footprint(tm_, tn_):
        # Pallas double-buffers every block (x panel, weight tile, output tile).
        return 2 * (tm_ * K * x_bytes + tn_ * K * w_bytes + tm_ * tn_ * o_bytes)

    # Shrink the dominant weight tile first (keep it a multiple of 128 lanes),
    # then the activation panel (multiple of 8 sublanes).
    while tn > 128 and tn != N and footprint(tm, tn) > budget:
        tn = max(128, (tn // 2) // 128 * 128)
    while tm > 8 and tm != M and footprint(tm, tn) > budget:
        tm = max(8, (tm // 2) // 8 * 8)
    return tm, tn, footprint(tm, tn)


def _matmul_xwt(x2d, weight, *, tm_max, tn_max, out_dtype):
    """x2d: [M, K], weight: [N, K]  ->  [M, N] = x2d @ weight.T (no HBM transpose)."""
    M, K = x2d.shape
    N, K2 = weight.shape
    assert K == K2, "hidden dims must match"

    x_bytes = x2d.dtype.itemsize
    w_bytes = weight.dtype.itemsize
    o_bytes = jnp.dtype(out_dtype).itemsize

    tm, tn, footprint = _select_tiles(
        M, N, K, x_bytes, w_bytes, o_bytes, tm_max, tn_max, budget=36 * _MIB
    )

    grid = (pl.cdiv(M, tm), pl.cdiv(N, tn))

    # Headroom for Mosaic-internal scratch; hard cap at 48 MiB so v7x (64 MiB
    # physical VMEM per core) keeps double-buffering alive.
    vmem_limit = int(min(max(footprint + 12 * _MIB, 32 * _MIB), 48 * _MIB))

    cost = pl.CostEstimate(
        flops=2 * M * N * K,
        transcendentals=0,
        bytes_accessed=M * K * x_bytes + N * K * w_bytes + M * N * o_bytes,
    )

    return pl.pallas_call(
        _lm_head_kernel,
        out_shape=jax.ShapeDtypeStruct((M, N), out_dtype),
        grid=grid,
        in_specs=[
            # Full-K activation panel, indexed only by i: resident across the
            # entire vocab sweep -> x is read from HBM exactly once.
            pl.BlockSpec((tm, K), lambda i, j: (i, 0)),
            # Full-K weight rows, native [vocab, hidden] layout (streams once per i).
            pl.BlockSpec((tn, K), lambda i, j: (j, 0)),
        ],
        out_specs=pl.BlockSpec((tm, tn), lambda i, j: (i, j)),
        compiler_params=pltpu.CompilerParams(
            dimension_semantics=("parallel", "parallel"),
            vmem_limit_bytes=vmem_limit,
        ),
        cost_estimate=cost,
    )(x2d, weight)


@functools.partial(
    jax.jit,
    static_argnames=("tm_max", "tn_max", "compute_dtype", "out_dtype"),
)
def parallel_linear_forward(
    hidden_states,
    weight,
    *,
    tm_max=256,
    tn_max=1024,
    compute_dtype=jnp.bfloat16,
    out_dtype=None,
):
    """ParallelLinear.forward.

    hidden_states: [seq, batch, hidden]   (NeoX [s, b, h] convention)
    weight:        [padded_vocab, hidden] (ColumnParallelLinear stores W as [out, in])
    returns:       (logits [seq, batch, padded_vocab], None)  -- bias=False

    For peak bandwidth pass hidden_states/weight already in `compute_dtype`
    (bf16); otherwise they are cast once here before the kernel.
    """
    if out_dtype is None:
        out_dtype = compute_dtype
    s, b, h = hidden_states.shape
    v = weight.shape[0]

    x2d = hidden_states.reshape(s * b, h).astype(compute_dtype)
    w = weight.astype(compute_dtype)

    out2d = _matmul_xwt(x2d, w, tm_max=tm_max, tn_max=tn_max, out_dtype=out_dtype)
    return out2d.reshape(s, b, v), None


def _xavier_normal(key, shape, dtype=jnp.float32):
    # nn.init.xavier_normal_ on a [fan_out, fan_in] weight
    fan_out, fan_in = shape
    std = (2.0 / (fan_in + fan_out)) ** 0.5
    return std * jax.random.normal(key, shape, dtype)


if __name__ == "__main__":
    # Case 1: small, module-consistent shapes (single-tile grid).
    seq, batch, hidden, padded_vocab = 8, 2, 32, 128
    key = jax.random.PRNGKey(0)
    k_x, k_w = jax.random.split(key)
    hidden_states = jax.random.normal(k_x, (seq, batch, hidden), jnp.float32)
    weight = _xavier_normal(k_w, (padded_vocab, hidden), jnp.float32)

    logits, bias = parallel_linear_forward(hidden_states, weight)
    logits = jax.block_until_ready(logits)

    ref = jnp.einsum(
        "sbh,vh->sbv",
        hidden_states.astype(jnp.bfloat16),
        weight.astype(jnp.bfloat16),
        preferred_element_type=jnp.float32,
    )
    assert logits.shape == (seq, batch, padded_vocab)
    assert logits.dtype == jnp.bfloat16
    assert bias is None
    err = float(jnp.max(jnp.abs(logits.astype(jnp.float32) - ref)))
    assert jnp.allclose(logits.astype(jnp.float32), ref, atol=2e-2, rtol=2e-2), err

    # Case 2: multi-tile grid with a partial (masked) M-tail block -- exercises the
    # pad-free cdiv edge handling (tm=64 does not divide M=72).
    seq2, batch2, hidden2, vocab2 = 24, 3, 96, 384
    hs2 = jax.random.normal(jax.random.PRNGKey(1), (seq2, batch2, hidden2), jnp.float32)
    w2 = _xavier_normal(jax.random.PRNGKey(2), (vocab2, hidden2), jnp.float32)

    logits2, _ = parallel_linear_forward(hs2, w2, tm_max=64, tn_max=128)
    logits2 = jax.block_until_ready(logits2)

    ref2 = jnp.einsum(
        "sbh,vh->sbv",
        hs2.astype(jnp.bfloat16),
        w2.astype(jnp.bfloat16),
        preferred_element_type=jnp.float32,
    )
    err2 = float(jnp.max(jnp.abs(logits2.astype(jnp.float32) - ref2)))
    assert logits2.shape == (seq2, batch2, vocab2)
    assert jnp.allclose(logits2.astype(jnp.float32), ref2, atol=2e-2, rtol=2e-2), err2

    print("KERNEL_OK")
</pallas_src>

<mosaic_0001>
module attributes {stable_mosaic.version = 11 : i64} {
  func.func @_lm_head_kernel(%arg0: i32, %arg1: i32, %arg2: memref<16x32xbf16, #tpu.memory_space<vmem>>, %arg3: memref<128x32xbf16, #tpu.memory_space<vmem>>, %arg4: memref<16x128xbf16, #tpu.memory_space<vmem>>) attributes {dimension_semantics = [#tpu.dimension_semantics<parallel>, #tpu.dimension_semantics<parallel>], iteration_bounds = array<i64: 1, 1>, scalar_prefetch = 0 : i64, scratch_operands = 0 : i64, tpu.core_type = #tpu.core_type<tc>, window_params = [{transform_indices = @transform_0, window_bounds = array<i64: 16, 32>}, {transform_indices = @transform_1, window_bounds = array<i64: 128, 32>}, {transform_indices = @transform_2, window_bounds = array<i64: 16, 128>}]} {
    %c0 = arith.constant 0 : index
    %c0_0 = arith.constant 0 : index
    %0 = vector.load %arg2[%c0, %c0_0] : memref<16x32xbf16, #tpu.memory_space<vmem>>, vector<16x32xbf16>
    %c0_1 = arith.constant 0 : index
    %c0_2 = arith.constant 0 : index
    %1 = vector.load %arg3[%c0_1, %c0_2] : memref<128x32xbf16, #tpu.memory_space<vmem>>, vector<128x32xbf16>
    %cst = arith.constant dense<0.000000e+00> : vector<16x128xf32>
    %2 = tpu.matmul %0, %1, %cst {dimension_numbers = #tpu.dot_dimension_numbers<[1], [1], [0], [0], [0, 0, 1, 0], [], []>} : vector<16x32xbf16>, vector<128x32xbf16>, vector<16x128xf32> -> vector<16x128xf32>
    %3 = arith.truncf %2 : vector<16x128xf32> to vector<16x128xbf16>
    %c0_3 = arith.constant 0 : index
    %c0_4 = arith.constant 0 : index
    %4 = vector.load %arg4[%c0_3, %c0_4] : memref<16x128xbf16, #tpu.memory_space<vmem>>, vector<16x128xbf16>
    tpu.vector_store %arg4[%c0_3, %c0_4], %3 {strides = array<i32>} : memref<16x128xbf16, #tpu.memory_space<vmem>>, vector<16x128xbf16>,
    return
  }
  func.func @transform_0(%arg0: i32, %arg1: i32) -> (i32, i32) {
    %c0_i32 = arith.constant 0 : i32
    %c0_i32_0 = arith.constant 0 : i32
    return %arg0, %c0_i32 : i32, i32
  }
  func.func @transform_1(%arg0: i32, %arg1: i32) -> (i32, i32) {
    %c0_i32 = arith.constant 0 : i32
    %c0_i32_0 = arith.constant 0 : i32
    return %arg1, %c0_i32 : i32, i32
  }
  func.func @transform_2(%arg0: i32, %arg1: i32) -> (i32, i32) {
    %c0_i32 = arith.constant 0 : i32
    return %arg0, %arg1 : i32, i32
  }
}

</mosaic_0001>

<llo_original>
// kernel: parallel_linear_forward.1
$region0: #{parallel_linear_forward.1}
  #allocation0 [shape = 'u32[]', space=smem, size = 0x4, offset = 0x4, fixed_abs, tag = 'smem constant byte address 0x4 - core index']
  #allocation1 [shape = 'u32[144,128]{1,0:T(1,128)}', space=vmem, size = 0x12000, scoped, tag = 'internal scratch']
  %s0 = inlined_call_operand.vmem [shape: bf16[16,32], index: 0, kind: input, shape index: {}]
  %s1 = inlined_call_operand.vmem [shape: bf16[128,32], index: 1, kind: input, shape index: {}]
  %s2 = inlined_call_operand.hbm [shape: bf16[16,128], index: 2, kind: output, shape index: {}]
  %s3 = sld [smem:[#allocation0]]
  $region18: #{parallel_linear_forward.1} parent=0
    _
  %s5 = ssub.s32 1, %s3
  %s6 = scalar_select 0, %s5, %s3
  $region1: #{parallel_linear_forward.1} parent=0
    #allocation2 [shape = 'u8[4096]{0}', space=vmem, size = 0x1000, scoped, tag = 'output window, operand 0, single buffered']
    #allocation3 [shape = 's32[1]{0}', space=sflag, size = 0x4, scoped, tag = 'scoped memory for parallel_linear_forward.1']
    %7 = vsyncpa [#allocation3], 0
    // Predicated region
    $region2: #{parallel_linear_forward.1} parent=1 // pred_check
      _
    $region3: #{parallel_linear_forward.1} parent=1 // pred_check_branch
      %9 = sbr.rel (0) target = $region5
    $region4: #{parallel_linear_forward.1} parent=1 // pred_region
      _
    $region5: #{parallel_linear_forward.1} parent=1 // pred_fallthru
      _
    // Predicated region
    $region6: #{parallel_linear_forward.1} parent=1 // pred_check
      _
    $region7: #{parallel_linear_forward.1} parent=1 // pred_check_branch
      %11 = sbr.rel (0) target = $region9
    $region8: #{parallel_linear_forward.1} parent=1 // pred_region
      _
    $region9: #{parallel_linear_forward.1} parent=1 // pred_fallthru
      _
    %v13 = vld [vmem:[%s0] sm:$0xf]
    %v14 = vld [vmem:[%s0 + $0x4] sm:$0xf]
    %v15 = vld [vmem:[%s1] sm:$0xf]
    %v16 = vld [vmem:[%s1 + $0x4] sm:$0xf]
    %v17 = vld [vmem:[%s1 + $0x8] sm:$0xf]
    %v18 = vld [vmem:[%s1 + $0xc] sm:$0xf]
    %v19 = vld [vmem:[%s1 + $0x10] sm:$0xf]
    %v20 = vld [vmem:[%s1 + $0x14] sm:$0xf]
    %v21 = vld [vmem:[%s1 + $0x18] sm:$0xf]
    %v22 = vld [vmem:[%s1 + $0x1c] sm:$0xf]
    %v23 = vld [vmem:[%s1 + $0x20] sm:$0xf]
    %v24 = vld [vmem:[%s1 + $0x24] sm:$0xf]
    %v25 = vld [vmem:[%s1 + $0x28] sm:$0xf]
    %v26 = vld [vmem:[%s1 + $0x2c] sm:$0xf]
    %v27 = vld [vmem:[%s1 + $0x30] sm:$0xf]
    %v28 = vld [vmem:[%s1 + $0x34] sm:$0xf]
    %v29 = vld [vmem:[%s1 + $0x38] sm:$0xf]
    %v30 = vld [vmem:[%s1 + $0x3c] sm:$0xf]
    %v33 = vunpack.c.l.b16 %v13
    %v34 = vunpack.c.l.b16 %v14
    %v35 = vpack.c.b16 %v34, %v33
    %v52 = vunpack.c.l.b16 %v15
    %v53 = vunpack.c.l.b16 %v16
    %v54 = vunpack.c.l.b16 %v17
    %v55 = vunpack.c.l.b16 %v18
    %v56 = vunpack.c.l.b16 %v19
    %v57 = vunpack.c.l.b16 %v20
    %v58 = vunpack.c.l.b16 %v21
    %v59 = vunpack.c.l.b16 %v22
    %v60 = vunpack.c.l.b16 %v23
    %v61 = vunpack.c.l.b16 %v24
    %v62 = vunpack.c.l.b16 %v25
    %v63 = vunpack.c.l.b16 %v26
    %v64 = vunpack.c.l.b16 %v27
    %v65 = vunpack.c.l.b16 %v28
    %v66 = vunpack.c.l.b16 %v29
    %v67 = vunpack.c.l.b16 %v30
    %v68 = vpack.c.b16 %v53, %v52
    %v69 = vpack.c.b16 %v55, %v54
    %v70 = vpack.c.b16 %v57, %v56
    %v71 = vpack.c.b16 %v59, %v58
    %v72 = vpack.c.b16 %v61, %v60
    %v73 = vpack.c.b16 %v63, %v62
    %v74 = vpack.c.b16 %v65, %v64
    %v75 = vpack.c.b16 %v67, %v66
    %vm76 = vcmask 261120
    %v78 = vsel %vm76, %v35, 0
    %v81 = vsel %vm76, %v68, 0
    %v84 = vsel %vm76, %v69, 0
    %v87 = vsel %vm76, %v70, 0
    %v90 = vsel %vm76, %v71, 0
    %v93 = vsel %vm76, %v72, 0
    %v96 = vsel %vm76, %v73, 0
    %v99 = vsel %vm76, %v74, 0
    %v102 = vsel %vm76, %v75, 0
    %104 = vmatprep.subr.bf16.mxu0 0
    %105 = vmatpush1.bf16.xpose.msra.mxu0 %v102
    %106 = vmatprep.subr.bf16.mxu0 0
    %107 = vmatpush1.bf16.xpose.msra.mxu0 %v99
    %108 = vmatprep.subr.bf16.mxu0 0
    %109 = vmatpush1.bf16.xpose.msra.mxu0 %v96
    %110 = vmatprep.subr.bf16.mxu0 0
    %111 = vmatpush1.bf16.xpose.msra.mxu0 %v93
    %112 = vmatprep.subr.bf16.mxu0 0
    %113 = vmatpush1.bf16.xpose.msra.mxu0 %v90
    %114 = vmatprep.subr.bf16.mxu0 0
    %115 = vmatpush1.bf16.xpose.msra.mxu0 %v87
    %116 = vmatprep.subr.bf16.mxu0 0
    %117 = vmatpush1.bf16.xpose.msra.mxu0 %v84
    %118 = vmatprep.subr.bf16.mxu0 0
    %119 = vmatpush1.bf16.xpose.msra.mxu0 %v81
    %120 = vmatprep.subr.bf16.mxu0 0
    %121 = vmatpush2.bf16.xpose.msra.mxu0 0
    %122 = vmatprep.subr.bf16.mxu0 0
    %123 = vmatpush2.bf16.xpose.msra.mxu0 0
    %124 = vmatprep.subr.bf16.mxu0 0
    %125 = vmatpush2.bf16.xpose.msra.mxu0 0
    %126 = vmatprep.subr.bf16.mxu0 0
    %127 = vmatpush2.bf16.xpose.msra.mxu0 0
    %128 = vmatprep.subr.bf16.mxu0 0
    %129 = vmatpush2.bf16.xpose.msra.mxu0 0
    %130 = vmatprep.subr.bf16.mxu0 0
    %131 = vmatpush2.bf16.xpose.msra.mxu0 0
    %132 = vmatprep.subr.bf16.mxu0 0
    %133 = vmatpush2.bf16.xpose.msra.mxu0 0
    %134 = vmatprep.subr.bf16.mxu0 0
    %135 = vmatpush2.bf16.xpose.msra.mxu0 0
    %136 = vmatprep.mubr.bf16.mxu0 0
    %137 = vmatmul.mubr.bf16.gmra.mxu0 %v78
    %v138 = vpop.f32.mrf.mxu0
    %v139 = vadd.f32 0.0, %v138
    %v140 = vpop.f32.mrf.mxu0
    %v141 = vpop.f32.mrf.mxu0
    %v142 = vadd.f32 0.0, %v141
    %v143 = vpop.f32.mrf.mxu0
    %144 = vdwg.mxu0
    %v145 = vpack.c.bf16 %v142, %v139
    %v147 = vunpack.c.l.b16 %v145
    %v148 = vunpack.c.h.b16 %v145
    %v149 = vpack.c.b16 %v147, %v147
    %v150 = vpack.c.b16 %v148, %v148
    %153 = vst [vmem:[#allocation2] sm:$0xf] %v149
    %154 = vst [vmem:[#allocation2 + $0x4] sm:$0xf] %v150
    // Predicated region
    $region10: #{parallel_linear_forward.1} parent=1 // pred_check
      _
    $region11: #{parallel_linear_forward.1} parent=1 // pred_check_branch
      %156 = sbr.rel (0) target = $region13
    $region12: #{parallel_linear_forward.1} parent=1 // pred_region
      %s158 = ssub.s32 128, 128
      %159 = vsyncadd [#allocation3], %s158
      %s160 = sshll.u32 [#allocation2], 4
      %s161 = int_to_ptr.vmem [resolvable:$true] %s160
      %166 = dma.vmem_to_hbm [thread:$0]  %s161, 128, %s2, [#allocation3], 64, 64, 4
    $region13: #{parallel_linear_forward.1} parent=1 // pred_fallthru
      _
    // Predicated region
    $region14: #{parallel_linear_forward.1} parent=1 // pred_check
      _
    $region15: #{parallel_linear_forward.1} parent=1 // pred_check_branch
      %168 = sbr.rel (0) target = $region17
    $region16: #{parallel_linear_forward.1} parent=1 // pred_region
      %169 = dma.done [#allocation3], 128
    $region17: #{parallel_linear_forward.1} parent=1 // pred_fallthru
      _
    %170 = vsyncpa [#allocation3], 1

</llo_original>
